<compile_context>
chip_gen: v5e
topology: v5e:2x2
jax: 0.10.0
libtpu: 0.0.40
codegen_flags: <defaults>
</compile_context>

<pallas_src>
import functools

import jax
import jax.numpy as jnp
from jax.experimental import pallas as pl
from jax.experimental.pallas import tpu as pltpu


def _round_up(x: int, m: int) -> int:
    return ((x + m - 1) // m) * m


def mlp_kernel(x_ref, w1_ref, b1_ref, w2_ref, b2_ref, out_ref, *, num_valid):
    # x_ref:  [TB, 784]   w1_ref: [784, 20]   b1_ref: [1, 20]
    # w2_ref: [20, 128]   b2_ref: [1, 128]    out_ref:[TB, 128]
    # (fc2 weights/bias zero-padded from 10 -> 128 columns; num_valid == 10)
    x = x_ref[...]

    # fc1 + ReLU (MXU matmul, f32 accumulation)
    h = jnp.dot(x, w1_ref[...], preferred_element_type=jnp.float32) + b1_ref[...]
    h = jnp.maximum(h, 0.0)

    # fc2 + ReLU (lane-dense 128-wide output)
    y = jnp.dot(h, w2_ref[...], preferred_element_type=jnp.float32) + b2_ref[...]
    y = jnp.maximum(y, 0.0)

    # log_softmax over the first `num_valid` columns only (pad columns masked).
    col = jax.lax.broadcasted_iota(jnp.int32, y.shape, 1)
    valid = col < num_valid
    y_m = jnp.where(valid, y, -jnp.inf)
    m = jnp.max(y_m, axis=1, keepdims=True)
    s = y_m - m
    lse = jnp.log(jnp.sum(jnp.exp(s), axis=1, keepdims=True))
    logp = jnp.where(valid, s - lse, 0.0)
    out_ref[...] = logp.astype(out_ref.dtype)


def mlp_forward(x, w1, b1, w2, b2, *, tb=1024):
    """x: any shape that flattens to [-1, 784] (e.g. NCHW [B,1,28,28]).

    w1: [784, 20], b1: [20], w2: [20, 10], b2: [10]  (weights stored [in, out]).
    Returns log-probabilities of shape [B, 10].
    """
    IN = 28 * 28
    x2d = x.reshape(-1, IN).astype(jnp.float32)
    B = x2d.shape[0]
    H = w1.shape[1]          # 20
    O = w2.shape[1]          # 10
    OP = 128                 # lane-dense padded output width

    # Batch tile: multiple of 8 (sublane), capped at `tb`; pad B to a multiple.
    TB = min(tb, _round_up(B, 8))
    B_pad = _round_up(B, TB)
    if B_pad != B:
        x2d = jnp.pad(x2d, ((0, B_pad - B), (0, 0)))

    b1r = b1.astype(jnp.float32).reshape(1, H)
    w2p = jnp.pad(w2.astype(jnp.float32), ((0, 0), (0, OP - O)))
    b2p = jnp.pad(b2.astype(jnp.float32).reshape(1, O), ((0, 0), (0, OP - O)))
    w1f = w1.astype(jnp.float32)

    grid = (B_pad // TB,)

    cost = pl.CostEstimate(
        flops=2 * B_pad * (IN * H + H * OP) + 6 * B_pad * OP,
        transcendentals=B_pad * (OP + 1),          # exp + log
        bytes_accessed=4 * (B_pad * IN + IN * H + H + H * OP + OP + B_pad * OP),
    )

    out_padded = pl.pallas_call(
        functools.partial(mlp_kernel, num_valid=O),
        out_shape=jax.ShapeDtypeStruct((B_pad, OP), jnp.float32),
        grid=grid,
        in_specs=[
            pl.BlockSpec((TB, IN), lambda i: (i, 0)),   # x: streamed per tile
            pl.BlockSpec((IN, H), lambda i: (0, 0)),    # w1: resident
            pl.BlockSpec((1, H), lambda i: (0, 0)),     # b1: resident
            pl.BlockSpec((H, OP), lambda i: (0, 0)),    # w2 (padded): resident
            pl.BlockSpec((1, OP), lambda i: (0, 0)),    # b2 (padded): resident
        ],
        out_specs=pl.BlockSpec((TB, OP), lambda i: (i, 0)),
        compiler_params=pltpu.CompilerParams(
            dimension_semantics=("parallel",),
        ),
        cost_estimate=cost,
    )(x2d, w1f, b1r, w2p, b2p)

    return out_padded[:B, :O]


def init_params(key, input_size=784, hidden=20, output_size=10):
    # Deterministic init mimicking PyTorch nn.Linear (uniform in +/- 1/sqrt(fan_in)).
    k1, k2, k3, k4 = jax.random.split(key, 4)
    bound1 = 1.0 / jnp.sqrt(input_size)
    bound2 = 1.0 / jnp.sqrt(hidden)
    # Stored as [in, out] (already transposed relative to PyTorch's [out, in]).
    w1 = jax.random.uniform(k1, (input_size, hidden), jnp.float32, -bound1, bound1)
    b1 = jax.random.uniform(k2, (hidden,), jnp.float32, -bound1, bound1)
    w2 = jax.random.uniform(k3, (hidden, output_size), jnp.float32, -bound2, bound2)
    b2 = jax.random.uniform(k4, (output_size,), jnp.float32, -bound2, bound2)
    return w1, b1, w2, b2


if __name__ == "__main__":
    key = jax.random.PRNGKey(0)
    kx, kp = jax.random.split(key)
    # Small batch of MNIST-shaped inputs (NCHW), flattened inside the wrapper.
    x = jax.random.normal(kx, (2, 1, 28, 28), jnp.float32)
    w1, b1, w2, b2 = init_params(kp)

    out = mlp_forward(x, w1, b1, w2, b2)
    jax.block_until_ready(out)

    # Sanity check against pure-JAX reference.
    x2d = x.reshape(-1, 784)
    h = jnp.maximum(x2d @ w1 + b1, 0.0)
    y = jnp.maximum(h @ w2 + b2, 0.0)
    ref = jax.nn.log_softmax(y, axis=1)
    assert out.shape == (2, 10)
    assert jnp.allclose(out, ref, atol=1e-5), "mismatch vs reference"
    print("KERNEL_OK")
</pallas_src>

<mosaic_0001>
module attributes {stable_mosaic.version = 11 : i64} {
  func.func @mlp_kernel(%arg0: i32, %arg1: memref<8x784xf32, #tpu.memory_space<vmem>>, %arg2: memref<784x20xf32, #tpu.memory_space<vmem>>, %arg3: memref<1x20xf32, #tpu.memory_space<vmem>>, %arg4: memref<20x128xf32, #tpu.memory_space<vmem>>, %arg5: memref<1x128xf32, #tpu.memory_space<vmem>>, %arg6: memref<8x128xf32, #tpu.memory_space<vmem>>) attributes {dimension_semantics = [#tpu.dimension_semantics<parallel>], iteration_bounds = array<i64: 1>, scalar_prefetch = 0 : i64, scratch_operands = 0 : i64, tpu.core_type = #tpu.core_type<tc>, window_params = [{transform_indices = @transform_0, window_bounds = array<i64: 8, 784>}, {pipeline_mode = #tpu.pipeline_mode<synchronous>, transform_indices = @transform_1, window_bounds = array<i64: 784, 20>}, {pipeline_mode = #tpu.pipeline_mode<synchronous>, transform_indices = @transform_2, window_bounds = array<i64: 1, 20>}, {pipeline_mode = #tpu.pipeline_mode<synchronous>, transform_indices = @transform_3, window_bounds = array<i64: 20, 128>}, {pipeline_mode = #tpu.pipeline_mode<synchronous>, transform_indices = @transform_4, window_bounds = array<i64: 1, 128>}, {transform_indices = @transform_5, window_bounds = array<i64: 8, 128>}]} {
    %c0 = arith.constant 0 : index
    %c0_0 = arith.constant 0 : index
    %0 = vector.load %arg1[%c0, %c0_0] : memref<8x784xf32, #tpu.memory_space<vmem>>, vector<8x784xf32>
    %c0_1 = arith.constant 0 : index
    %c0_2 = arith.constant 0 : index
    %1 = vector.load %arg2[%c0_1, %c0_2] : memref<784x20xf32, #tpu.memory_space<vmem>>, vector<784x20xf32>
    %cst = arith.constant dense<0.000000e+00> : vector<8x20xf32>
    %2 = tpu.matmul %0, %1, %cst {dimension_numbers = #tpu.dot_dimension_numbers<[1], [0], [0], [1], [0, 0, 1, 1], [], []>} : vector<8x784xf32>, vector<784x20xf32>, vector<8x20xf32> -> vector<8x20xf32>
    %c0_3 = arith.constant 0 : index
    %c0_4 = arith.constant 0 : index
    %3 = vector.load %arg3[%c0_3, %c0_4] : memref<1x20xf32, #tpu.memory_space<vmem>>, vector<1x20xf32>
    %4 = vector.broadcast %3 : vector<1x20xf32> to vector<8x20xf32>
    %5 = arith.addf %2, %4 : vector<8x20xf32>
    %cst_5 = arith.constant 0.000000e+00 : f32
    %6 = vector.broadcast %cst_5 : f32 to vector<8x20xf32>
    %7 = arith.maximumf %5, %6 : vector<8x20xf32>
    %c0_6 = arith.constant 0 : index
    %c0_7 = arith.constant 0 : index
    %8 = vector.load %arg4[%c0_6, %c0_7] : memref<20x128xf32, #tpu.memory_space<vmem>>, vector<20x128xf32>
    %cst_8 = arith.constant dense<0.000000e+00> : vector<8x128xf32>
    %9 = tpu.matmul %7, %8, %cst_8 {dimension_numbers = #tpu.dot_dimension_numbers<[1], [0], [0], [1], [0, 0, 1, 1], [], []>} : vector<8x20xf32>, vector<20x128xf32>, vector<8x128xf32> -> vector<8x128xf32>
    %c0_9 = arith.constant 0 : index
    %c0_10 = arith.constant 0 : index
    %10 = vector.load %arg5[%c0_9, %c0_10] : memref<1x128xf32, #tpu.memory_space<vmem>>, vector<1x128xf32>
    %11 = vector.broadcast %10 : vector<1x128xf32> to vector<8x128xf32>
    %12 = arith.addf %9, %11 : vector<8x128xf32>
    %cst_11 = arith.constant 0.000000e+00 : f32
    %13 = vector.broadcast %cst_11 : f32 to vector<8x128xf32>
    %14 = arith.maximumf %12, %13 : vector<8x128xf32>
    %15 = tpu.iota {dimensions = array<i32: 1>} : vector<8x128xi32>
    %c10_i32 = arith.constant 10 : i32
    %16 = vector.broadcast %c10_i32 : i32 to vector<8x128xi32>
    %17 = arith.cmpi slt, %15, %16 : vector<8x128xi32>
    %cst_12 = arith.constant 0xFF800000 : f32
    %18 = vector.broadcast %cst_12 : f32 to vector<8x128xf32>
    %19 = arith.select %17, %14, %18 : vector<8x128xi1>, vector<8x128xf32>
    %cst_13 = arith.constant dense<0xFF800000> : vector<8xf32>
    %20 = vector.multi_reduction <maximumf>, %19, %cst_13 [1] : vector<8x128xf32> to vector<8xf32>
    %21 = vector.shape_cast %20 : vector<8xf32> to vector<8x1xf32>
    %22 = vector.broadcast %21 : vector<8x1xf32> to vector<8x128xf32>
    %23 = arith.subf %19, %22 : vector<8x128xf32>
    %24 = math.exp %23 : vector<8x128xf32>
    %cst_14 = arith.constant dense<0.000000e+00> : vector<8xf32>
    %25 = vector.multi_reduction <add>, %24, %cst_14 [1] : vector<8x128xf32> to vector<8xf32>
    %26 = vector.shape_cast %25 : vector<8xf32> to vector<8x1xf32>
    %27 = math.log %26 : vector<8x1xf32>
    %28 = vector.broadcast %27 : vector<8x1xf32> to vector<8x128xf32>
    %29 = arith.subf %23, %28 : vector<8x128xf32>
    %cst_15 = arith.constant 0.000000e+00 : f32
    %30 = vector.broadcast %cst_15 : f32 to vector<8x128xf32>
    %31 = arith.select %17, %29, %30 : vector<8x128xi1>, vector<8x128xf32>
    %c0_16 = arith.constant 0 : index
    %c0_17 = arith.constant 0 : index
    %32 = vector.load %arg6[%c0_16, %c0_17] : memref<8x128xf32, #tpu.memory_space<vmem>>, vector<8x128xf32>
    tpu.vector_store %arg6[%c0_16, %c0_17], %31 {strides = array<i32>} : memref<8x128xf32, #tpu.memory_space<vmem>>, vector<8x128xf32>,
    return
  }
  func.func @transform_0(%arg0: i32) -> (i32, i32) {
    %c0_i32 = arith.constant 0 : i32
    %c0_i32_0 = arith.constant 0 : i32
    return %arg0, %c0_i32 : i32, i32
  }
  func.func @transform_1(%arg0: i32) -> (i32, i32) {
    %c0_i32 = arith.constant 0 : i32
    %c0_i32_0 = arith.constant 0 : i32
    %c0_i32_1 = arith.constant 0 : i32
    return %c0_i32, %c0_i32_0 : i32, i32
  }
  func.func @transform_2(%arg0: i32) -> (i32, i32) {
    %c0_i32 = arith.constant 0 : i32
    %c0_i32_0 = arith.constant 0 : i32
    %c0_i32_1 = arith.constant 0 : i32
    return %c0_i32, %c0_i32_0 : i32, i32
  }
  func.func @transform_3(%arg0: i32) -> (i32, i32) {
    %c0_i32 = arith.constant 0 : i32
    %c0_i32_0 = arith.constant 0 : i32
    %c0_i32_1 = arith.constant 0 : i32
    return %c0_i32, %c0_i32_0 : i32, i32
  }
  func.func @transform_4(%arg0: i32) -> (i32, i32) {
    %c0_i32 = arith.constant 0 : i32
    %c0_i32_0 = arith.constant 0 : i32
    %c0_i32_1 = arith.constant 0 : i32
    return %c0_i32, %c0_i32_0 : i32, i32
  }
  func.func @transform_5(%arg0: i32) -> (i32, i32) {
    %c0_i32 = arith.constant 0 : i32
    %c0_i32_0 = arith.constant 0 : i32
    return %arg0, %c0_i32 : i32, i32
  }
}

</mosaic_0001>

<llo_original>
// kernel: tpu_custom_call.1
$region0: #{tpu_custom_call.1}
  #allocation0 [shape = 'u32[]', space=smem, size = 0x4, offset = 0x4, fixed_abs, tag = 'smem constant byte address 0x4 - core index']
  #allocation1 [shape = 'u32[72,128]{1,0:T(1,128)}', space=vmem, size = 0x9000, scoped, tag = 'internal scratch']
  %s0 = inlined_call_operand.vmem [shape: f32[8,784], index: 0, kind: input, shape index: {}]
  %s1 = inlined_call_operand.vmem [shape: f32[784,20], index: 1, kind: input, shape index: {}]
  %s2 = inlined_call_operand.vmem [shape: f32[1,20], index: 2, kind: input, shape index: {}]
  %s3 = inlined_call_operand.vmem [shape: f32[20,128], index: 3, kind: input, shape index: {}]
  %s4 = inlined_call_operand.vmem [shape: f32[1,128], index: 4, kind: input, shape index: {}]
  %s5 = inlined_call_operand.hbm [shape: f32[8,128], index: 5, kind: output, shape index: {}]
  %s6 = sld [smem:[#allocation0]]
  $region30: #{tpu_custom_call.1} parent=0
    _
  %s8 = ssub.s32 1, %s6
  %s9 = scalar_select 0, %s8, %s6
  $region1: #{tpu_custom_call.1} parent=0
    #allocation2 [shape = 'u8[4096]{0}', space=vmem, size = 0x1000, scoped, tag = 'output window, operand 0, single buffered']
    #allocation3 [shape = 's32[1]{0}', space=sflag, size = 0x4, scoped, tag = 'scoped memory for tpu_custom_call.1']
    %10 = vsyncpa [#allocation3], 0
    // Predicated region
    $region2: #{tpu_custom_call.1} parent=1 // pred_check
      _
    $region3: #{tpu_custom_call.1} parent=1 // pred_check_branch
      %12 = sbr.rel (0) target = $region5
    $region4: #{tpu_custom_call.1} parent=1 // pred_region
      _
    $region5: #{tpu_custom_call.1} parent=1 // pred_fallthru
      _
    // Predicated region
    $region6: #{tpu_custom_call.1} parent=1 // pred_check
      _
    $region7: #{tpu_custom_call.1} parent=1 // pred_check_branch
      %14 = sbr.rel (0) target = $region9
    $region8: #{tpu_custom_call.1} parent=1 // pred_region
      _
    $region9: #{tpu_custom_call.1} parent=1 // pred_fallthru
      _
    // Predicated region
    $region10: #{tpu_custom_call.1} parent=1 // pred_check
      _
    $region11: #{tpu_custom_call.1} parent=1 // pred_check_branch
      %16 = sbr.rel (0) target = $region13
    $region12: #{tpu_custom_call.1} parent=1 // pred_region
      _
    $region13: #{tpu_custom_call.1} parent=1 // pred_fallthru
      _
    // Predicated region
    $region14: #{tpu_custom_call.1} parent=1 // pred_check
      _
    $region15: #{tpu_custom_call.1} parent=1 // pred_check_branch
      %18 = sbr.rel (0) target = $region17
    $region16: #{tpu_custom_call.1} parent=1 // pred_region
      _
    $region17: #{tpu_custom_call.1} parent=1 // pred_fallthru
      _
    // Predicated region
    $region18: #{tpu_custom_call.1} parent=1 // pred_check
      _
    $region19: #{tpu_custom_call.1} parent=1 // pred_check_branch
      %20 = sbr.rel (0) target = $region21
    $region20: #{tpu_custom_call.1} parent=1 // pred_region
      _
    $region21: #{tpu_custom_call.1} parent=1 // pred_fallthru
      _
    %v21 = vld [vmem:[%s0] sm:$0xff]
    %v22 = vld [vmem:[%s0 + $0x8] sm:$0xff]
    %v23 = vld [vmem:[%s0 + $0x10] sm:$0xff]
    %v24 = vld [vmem:[%s0 + $0x18] sm:$0xff]
    %v25 = vld [vmem:[%s0 + $0x20] sm:$0xff]
    %v26 = vld [vmem:[%s0 + $0x28] sm:$0xff]
    %v27 = vld [vmem:[%s0 + $0x30] sm:$0xff]
    %v28 = vld [vmem:[%s1] sm:$0xff]
    %v29 = vld [vmem:[%s1 + $0x8] sm:$0xff]
    %v30 = vld [vmem:[%s1 + $0x10] sm:$0xff]
    %v31 = vld [vmem:[%s1 + $0x18] sm:$0xff]
    %v32 = vld [vmem:[%s1 + $0x20] sm:$0xff]
    %v33 = vld [vmem:[%s1 + $0x28] sm:$0xff]
    %v34 = vld [vmem:[%s1 + $0x30] sm:$0xff]
    %v35 = vld [vmem:[%s1 + $0x38] sm:$0xff]
    %v36 = vld [vmem:[%s1 + $0x40] sm:$0xff]
    %v37 = vld [vmem:[%s1 + $0x48] sm:$0xff]
    %v38 = vld [vmem:[%s1 + $0x50] sm:$0xff]
    %v39 = vld [vmem:[%s1 + $0x58] sm:$0xff]
    %v40 = vld [vmem:[%s1 + $0x60] sm:$0xff]
    %v41 = vld [vmem:[%s1 + $0x68] sm:$0xff]
    %v42 = vld [vmem:[%s1 + $0x70] sm:$0xff]
    %v43 = vld [vmem:[%s1 + $0x78] sm:$0xff]
    %v44 = vld [vmem:[%s1 + $0x80] sm:$0xff]
    %v45 = vld [vmem:[%s1 + $0x88] sm:$0xff]
    %v46 = vld [vmem:[%s1 + $0x90] sm:$0xff]
    %v47 = vld [vmem:[%s1 + $0x98] sm:$0xff]
    %v48 = vld [vmem:[%s1 + $0xa0] sm:$0xff]
    %v49 = vld [vmem:[%s1 + $0xa8] sm:$0xff]
    %v50 = vld [vmem:[%s1 + $0xb0] sm:$0xff]
    %v51 = vld [vmem:[%s1 + $0xb8] sm:$0xff]
    %v52 = vld [vmem:[%s1 + $0xc0] sm:$0xff]
    %v53 = vld [vmem:[%s1 + $0xc8] sm:$0xff]
    %v54 = vld [vmem:[%s1 + $0xd0] sm:$0xff]
    %v55 = vld [vmem:[%s1 + $0xd8] sm:$0xff]
    %v56 = vld [vmem:[%s1 + $0xe0] sm:$0xff]
    %v57 = vld [vmem:[%s1 + $0xe8] sm:$0xff]
    %v58 = vld [vmem:[%s1 + $0xf0] sm:$0xff]
    %v59 = vld [vmem:[%s1 + $0xf8] sm:$0xff]
    %v60 = vld [vmem:[%s1 + $0x100] sm:$0xff]
    %v61 = vld [vmem:[%s1 + $0x108] sm:$0xff]
    %v62 = vld [vmem:[%s1 + $0x110] sm:$0xff]
    %v63 = vld [vmem:[%s1 + $0x118] sm:$0xff]
    %v64 = vld [vmem:[%s1 + $0x120] sm:$0xff]
    %v65 = vld [vmem:[%s1 + $0x128] sm:$0xff]
    %v66 = vld [vmem:[%s1 + $0x130] sm:$0xff]
    %v67 = vld [vmem:[%s1 + $0x138] sm:$0xff]
    %v68 = vld [vmem:[%s1 + $0x140] sm:$0xff]
    %v69 = vld [vmem:[%s1 + $0x148] sm:$0xff]
    %v70 = vld [vmem:[%s1 + $0x150] sm:$0xff]
    %v71 = vld [vmem:[%s1 + $0x158] sm:$0xff]
    %v72 = vld [vmem:[%s1 + $0x160] sm:$0xff]
    %v73 = vld [vmem:[%s1 + $0x168] sm:$0xff]
    %v74 = vld [vmem:[%s1 + $0x170] sm:$0xff]
    %v75 = vld [vmem:[%s1 + $0x178] sm:$0xff]
    %v76 = vld [vmem:[%s1 + $0x180] sm:$0xff]
    %v77 = vld [vmem:[%s1 + $0x188] sm:$0xff]
    %v78 = vld [vmem:[%s1 + $0x190] sm:$0xff]
    %v79 = vld [vmem:[%s1 + $0x198] sm:$0xff]
    %v80 = vld [vmem:[%s1 + $0x1a0] sm:$0xff]
    %v81 = vld [vmem:[%s1 + $0x1a8] sm:$0xff]
    %v82 = vld [vmem:[%s1 + $0x1b0] sm:$0xff]
    %v83 = vld [vmem:[%s1 + $0x1b8] sm:$0xff]
    %v84 = vld [vmem:[%s1 + $0x1c0] sm:$0xff]
    %v85 = vld [vmem:[%s1 + $0x1c8] sm:$0xff]
    %v86 = vld [vmem:[%s1 + $0x1d0] sm:$0xff]
    %v87 = vld [vmem:[%s1 + $0x1d8] sm:$0xff]
    %v88 = vld [vmem:[%s1 + $0x1e0] sm:$0xff]
    %v89 = vld [vmem:[%s1 + $0x1e8] sm:$0xff]
    %v90 = vld [vmem:[%s1 + $0x1f0] sm:$0xff]
    %v91 = vld [vmem:[%s1 + $0x1f8] sm:$0xff]
    %v92 = vld [vmem:[%s1 + $0x200] sm:$0xff]
    %v93 = vld [vmem:[%s1 + $0x208] sm:$0xff]
    %v94 = vld [vmem:[%s1 + $0x210] sm:$0xff]
    %v95 = vld [vmem:[%s1 + $0x218] sm:$0xff]
    %v96 = vld [vmem:[%s1 + $0x220] sm:$0xff]
    %v97 = vld [vmem:[%s1 + $0x228] sm:$0xff]
    %v98 = vld [vmem:[%s1 + $0x230] sm:$0xff]
    %v99 = vld [vmem:[%s1 + $0x238] sm:$0xff]
    %v100 = vld [vmem:[%s1 + $0x240] sm:$0xff]
    %v101 = vld [vmem:[%s1 + $0x248] sm:$0xff]
    %v102 = vld [vmem:[%s1 + $0x250] sm:$0xff]
    %v103 = vld [vmem:[%s1 + $0x258] sm:$0xff]
    %v104 = vld [vmem:[%s1 + $0x260] sm:$0xff]
    %v105 = vld [vmem:[%s1 + $0x268] sm:$0xff]
    %v106 = vld [vmem:[%s1 + $0x270] sm:$0xff]
    %v107 = vld [vmem:[%s1 + $0x278] sm:$0xff]
    %v108 = vld [vmem:[%s1 + $0x280] sm:$0xff]
    %v109 = vld [vmem:[%s1 + $0x288] sm:$0xff]
    %v110 = vld [vmem:[%s1 + $0x290] sm:$0xff]
    %v111 = vld [vmem:[%s1 + $0x298] sm:$0xff]
    %v112 = vld [vmem:[%s1 + $0x2a0] sm:$0xff]
    %v113 = vld [vmem:[%s1 + $0x2a8] sm:$0xff]
    %v114 = vld [vmem:[%s1 + $0x2b0] sm:$0xff]
    %v115 = vld [vmem:[%s1 + $0x2b8] sm:$0xff]
    %v116 = vld [vmem:[%s1 + $0x2c0] sm:$0xff]
    %v117 = vld [vmem:[%s1 + $0x2c8] sm:$0xff]
    %v118 = vld [vmem:[%s1 + $0x2d0] sm:$0xff]
    %v119 = vld [vmem:[%s1 + $0x2d8] sm:$0xff]
    %v120 = vld [vmem:[%s1 + $0x2e0] sm:$0xff]
    %v121 = vld [vmem:[%s1 + $0x2e8] sm:$0xff]
    %v122 = vld [vmem:[%s1 + $0x2f0] sm:$0xff]
    %v123 = vld [vmem:[%s1 + $0x2f8] sm:$0xff]
    %v124 = vld [vmem:[%s1 + $0x300] sm:$0xff]
    %v125 = vld [vmem:[%s1 + $0x308] sm:$0xff]
    %v126 = vld [vmem:[%s2] sm:$0x1]
    %v128 = vperm.slane %v126, 0
    %vm130 = vcmask 130048
    %v132 = vsel %vm130, %v27, 0
    %134 = vmatpush.msra.mxu0 %v43
    %135 = vmatpush.msra.mxu0 %v42
    %136 = vmatpush.msra.mxu0 %v41
    %137 = vmatpush.msra.mxu0 %v40
    %138 = vmatpush.msra.mxu0 %v39
    %139 = vmatpush.msra.mxu0 %v38
    %140 = vmatpush.msra.mxu0 %v37
    %141 = vmatpush.msra.mxu0 %v36
    %142 = vmatpush.msra.mxu0 %v35
    %143 = vmatpush.msra.mxu0 %v34
    %144 = vmatpush.msra.mxu0 %v33
    %145 = vmatpush.msra.mxu0 %v32
    %146 = vmatpush.msra.mxu0 %v31
    %147 = vmatpush.msra.mxu0 %v30
    %148 = vmatpush.msra.mxu0 %v29
    %149 = vmatpush.msra.mxu0 %v28
    %150 = vmatmul.f32.gmra.mxu0 %v21
    %v151 = vpop.f32.mrf.mxu0
    %v152 = vadd.f32 %v128, %v151
    %153 = vdwg.mxu0
    %154 = vmatpush.msra.mxu0 %v59
    %155 = vmatpush.msra.mxu0 %v58
    %156 = vmatpush.msra.mxu0 %v57
    %157 = vmatpush.msra.mxu0 %v56
    %158 = vmatpush.msra.mxu0 %v55
    %159 = vmatpush.msra.mxu0 %v54
    %160 = vmatpush.msra.mxu0 %v53
    %161 = vmatpush.msra.mxu0 %v52
    %162 = vmatpush.msra.mxu0 %v51
    %163 = vmatpush.msra.mxu0 %v50
    %164 = vmatpush.msra.mxu0 %v49
    %165 = vmatpush.msra.mxu0 %v48
    %166 = vmatpush.msra.mxu0 %v47
    %167 = vmatpush.msra.mxu0 %v46
    %168 = vmatpush.msra.mxu0 %v45
    %169 = vmatpush.msra.mxu0 %v44
    %170 = vmatmul.f32.gmra.mxu0 %v22
    %v171 = vpop.f32.mrf.mxu0
    %v172 = vadd.f32 %v152, %v171
    %173 = vdwg.mxu0
    %174 = vmatpush.msra.mxu0 %v75
    %175 = vmatpush.msra.mxu0 %v74
    %176 = vmatpush.msra.mxu0 %v73
    %177 = vmatpush.msra.mxu0 %v72
    %178 = vmatpush.msra.mxu0 %v71
    %179 = vmatpush.msra.mxu0 %v70
    %180 = vmatpush.msra.mxu0 %v69
    %181 = vmatpush.msra.mxu0 %v68
    %182 = vmatpush.msra.mxu0 %v67
    %183 = vmatpush.msra.mxu0 %v66
    %184 = vmatpush.msra.mxu0 %v65
    %185 = vmatpush.msra.mxu0 %v64
    %186 = vmatpush.msra.mxu0 %v63
    %187 = vmatpush.msra.mxu0 %v62
    %188 = vmatpush.msra.mxu0 %v61
    %189 = vmatpush.msra.mxu0 %v60
    %190 = vmatmul.f32.gmra.mxu0 %v23
    %v191 = vpop.f32.mrf.mxu0
    %v192 = vadd.f32 %v172, %v191
    %193 = vdwg.mxu0
    %194 = vmatpush.msra.mxu0 %v91
    %195 = vmatpush.msra.mxu0 %v90
    %196 = vmatpush.msra.mxu0 %v89
    %197 = vmatpush.msra.mxu0 %v88
    %198 = vmatpush.msra.mxu0 %v87
    %199 = vmatpush.msra.mxu0 %v86
    %200 = vmatpush.msra.mxu0 %v85
    %201 = vmatpush.msra.mxu0 %v84
    %202 = vmatpush.msra.mxu0 %v83
    %203 = vmatpush.msra.mxu0 %v82
    %204 = vmatpush.msra.mxu0 %v81
    %205 = vmatpush.msra.mxu0 %v80
    %206 = vmatpush.msra.mxu0 %v79
    %207 = vmatpush.msra.mxu0 %v78
    %208 = vmatpush.msra.mxu0 %v77
    %209 = vmatpush.msra.mxu0 %v76
    %210 = vmatmul.f32.gmra.mxu0 %v24
    %v211 = vpop.f32.mrf.mxu0
    %v212 = vadd.f32 %v192, %v211
    %213 = vdwg.mxu0
    %214 = vmatpush.msra.mxu0 %v107
    %215 = vmatpush.msra.mxu0 %v106
    %216 = vmatpush.msra.mxu0 %v105
    %217 = vmatpush.msra.mxu0 %v104
    %218 = vmatpush.msra.mxu0 %v103
    %219 = vmatpush.msra.mxu0 %v102
    %220 = vmatpush.msra.mxu0 %v101
    %221 = vmatpush.msra.mxu0 %v100
    %222 = vmatpush.msra.mxu0 %v99
    %223 = vmatpush.msra.mxu0 %v98
    %224 = vmatpush.msra.mxu0 %v97
    %225 = vmatpush.msra.mxu0 %v96
    %226 = vmatpush.msra.mxu0 %v95
    %227 = vmatpush.msra.mxu0 %v94
    %228 = vmatpush.msra.mxu0 %v93
    %229 = vmatpush.msra.mxu0 %v92
    %230 = vmatmul.f32.gmra.mxu0 %v25
    %v231 = vpop.f32.mrf.mxu0
    %v232 = vadd.f32 %v212, %v231
    %233 = vdwg.mxu0
    %234 = vmatpush.msra.mxu0 %v123
    %235 = vmatpush.msra.mxu0 %v122
    %236 = vmatpush.msra.mxu0 %v121
    %237 = vmatpush.msra.mxu0 %v120
    %238 = vmatpush.msra.mxu0 %v119
    %239 = vmatpush.msra.mxu0 %v118
    %240 = vmatpush.msra.mxu0 %v117
    %241 = vmatpush.msra.mxu0 %v116
    %242 = vmatpush.msra.mxu0 %v115
    %243 = vmatpush.msra.mxu0 %v114
    %244 = vmatpush.msra.mxu0 %v113
    %245 = vmatpush.msra.mxu0 %v112
    %246 = vmatpush.msra.mxu0 %v111
    %247 = vmatpush.msra.mxu0 %v110
    %248 = vmatpush.msra.mxu0 %v109
    %249 = vmatpush.msra.mxu0 %v108
    %250 = vmatmul.f32.gmra.mxu0 %v26
    %v251 = vpop.f32.mrf.mxu0
    %v252 = vadd.f32 %v232, %v251
    %253 = vdwg.mxu0
    %254 = vmatpush.msra.mxu0 0.0
    %255 = vmatpush.msra.mxu0 0.0
    %256 = vmatpush.msra.mxu0 0.0
    %257 = vmatpush.msra.mxu0 0.0
    %258 = vmatpush.msra.mxu0 0.0
    %259 = vmatpush.msra.mxu0 0.0
    %260 = vmatpush.msra.mxu0 0.0
    %261 = vmatpush.msra.mxu0 0.0
    %262 = vmatpush.msra.mxu0 0.0
    %263 = vmatpush.msra.mxu0 0.0
    %264 = vmatpush.msra.mxu0 0.0
    %265 = vmatpush.msra.mxu0 0.0
    %266 = vmatpush.msra.mxu0 0.0
    %267 = vmatpush.msra.mxu0 0.0
    %268 = vmatpush.msra.mxu0 %v125
    %269 = vmatpush.msra.mxu0 %v124
    %270 = vmatmul.f32.gmra.mxu0 %v132
    %v271 = vpop.f32.mrf.mxu0
    %v272 = vadd.f32 %v252, %v271
    %273 = vdwg.mxu0
    %v274 = vmax.f32 %v272, 0.0
    %v275 = vld [vmem:[%s3] sm:$0xff]
    %v276 = vld [vmem:[%s3 + $0x8] sm:$0xff]
    %v277 = vld [vmem:[%s3 + $0x10] sm:$0xf]
    %v278 = vld [vmem:[%s4] sm:$0x1]
    %v280 = vperm.slane %v278, 0
    %vm282 = vcmask 162816
    %v284 = vsel %vm282, %v274, 0
    %vm286 = vcmask 1043456
    %v288 = vsel %vm286, %v277, 0
    %290 = vmatpush.msra.mxu0 0.0
    %291 = vmatpush.msra.mxu0 0.0
    %292 = vmatpush.msra.mxu0 0.0
    %293 = vmatpush.msra.mxu0 0.0
    %294 = vmatpush.msra.mxu0 0.0
    %295 = vmatpush.msra.mxu0 0.0
    %296 = vmatpush.msra.mxu0 0.0
    %297 = vmatpush.msra.mxu0 0.0
    %298 = vmatpush.msra.mxu0 0.0
    %299 = vmatpush.msra.mxu0 0.0
    %300 = vmatpush.msra.mxu0 0.0
    %301 = vmatpush.msra.mxu0 0.0
    %302 = vmatpush.msra.mxu0 0.0
    %303 = vmatpush.msra.mxu0 %v288
    %304 = vmatpush.msra.mxu0 %v276
    %305 = vmatpush.msra.mxu0 %v275
    %306 = vmatmul.f32.gmra.mxu0 %v284
    %v307 = vpop.f32.mrf.mxu0
    %v308 = vadd.f32 %v280, %v307
    %309 = vdwg.mxu0
    %v310 = vmax.f32 %v308, 0.0
    %v311 = vlaneseq
    %v312 = vand.u32 %v311, 127
    %vm313 = vcmp.lt.s32.totalorder %v312, 10
    %v314 = vsel %vm313, %v310, -inf
    %315 = vmax.xlane.f32.xlu0 %v314
    %v316 = vpop.xlane.xlu0 %315
    %v317 = vsub.f32 %v314, %v316
    %v318 = vmul.f32 %v317, 1.442695
    %v319 = vpow.pop %v318
    %320 = vadd.xlane.f32.xlu0 %v319
    %v321 = vpop.xlane.xlu0 %320
    %v322 = vlog2.pop %v321
    %v323 = vmul.f32 %v322, 0.6931472
    %v324 = vsub.f32 %v317, %v323
    %v325 = vsel %vm313, %v324, 0.0
    %326 = vst [vmem:[#allocation2] sm:$0xff] %v325
    // Predicated region
    $region22: #{tpu_custom_call.1} parent=1 // pred_check
      _
    $region23: #{tpu_custom_call.1} parent=1 // pred_check_branch
      %328 = sbr.rel (0) target = $region25
    $region24: #{tpu_custom_call.1} parent=1 // pred_region
      %330 = vsyncadd [#allocation3], 0
      %s332 = sshll.u32 [#allocation2], 4
      %s333 = int_to_ptr.vmem [resolvable:$true] %s332
      %s334 = sshll.u32 %s5, 4
      %s335 = int_to_ptr.hbm [resolvable:$true] %s334
      %337 = dma.vmem_to_hbm [thread:$0]  %s333, 128, %s335, [#allocation3]
    $region25: #{tpu_custom_call.1} parent=1 // pred_fallthru
      _
    // Predicated region
    $region26: #{tpu_custom_call.1} parent=1 // pred_check
      _
    $region27: #{tpu_custom_call.1} parent=1 // pred_check_branch
      %339 = sbr.rel (0) target = $region29
    $region28: #{tpu_custom_call.1} parent=1 // pred_region
      %341 = dma.done [#allocation3], 128
    $region29: #{tpu_custom_call.1} parent=1 // pred_fallthru
      _
    %342 = vsyncpa [#allocation3], 1

</llo_original>
